<compile_context>
chip_gen: v5e
topology: v5e:2x2
jax: 0.10.0
libtpu: 0.0.40
codegen_flags: <defaults>
</compile_context>

<pallas_src>
import numpy as np
import jax
import jax.numpy as jnp
from jax.experimental import pallas as pl
from jax.experimental.pallas import tpu as pltpu

TWO_PI = 2.0 * np.pi


def _round_up(x, m):
    return (x + m - 1) // m * m


def _pick_tile(bmp, cap):
    """Largest multiple-of-8 divisor of bmp that is <= cap (bmp % 8 == 0)."""
    best = 8
    t = 8
    limit = min(cap, bmp)
    while t <= limit:
        if bmp % t == 0:
            best = t
        t += 8
    return best


# ----------------------------- Pallas kernel ------------------------------- #
# params columns (per ROI): [Ax, Bx, Tx, Az, Bz, Tz, sc, cy]
# The affine coefficients fold aug-rotation, scale, flip, ROI-center shift and
# canonical heading rotation:
#   x_out = Ax*x + Bx*z + Tx
#   z_out = Az*x + Bz*z + Tz
#   y_out = sc*y - cy

def _ptl_kernel(params_ref, pts_ref, out_ref):
    Ax = params_ref[:, 0:1]
    Bx = params_ref[:, 1:2]
    Tx = params_ref[:, 2:3]
    Az = params_ref[:, 3:4]
    Bz = params_ref[:, 4:5]
    Tz = params_ref[:, 5:6]
    sc = params_ref[:, 6:7]
    cy = params_ref[:, 7:8]

    x = pts_ref[0]                     # (tile_bm, N) — ROIs on sublanes
    y = pts_ref[1]
    z = pts_ref[2]

    # fused affine per-point transform (pure VPU work)
    out_ref[0] = Ax * x + Bx * z + Tx
    out_ref[1] = sc * y - cy
    out_ref[2] = Az * x + Bz * z + Tz


def ptl_transform(params, pts):
    """params: (BM, 8) f32; pts: (3, BM, N) f32 -> (3, BM, N) f32."""
    _, BM, N = pts.shape

    # pad the ROI axis only to a sublane multiple (8); never near-double it
    BMp = _round_up(BM, 8)
    if BMp != BM:
        pad = BMp - BM
        params = jnp.pad(params, ((0, pad), (0, 0)))
        pts = jnp.pad(pts, ((0, 0), (0, pad), (0, 0)))

    # big tiles amortize the ~0.35us/step overhead; 1024 rows keeps the
    # double-buffered working set (~6.3 MiB at N=128) inside v5e's 16 MiB
    # scoped VMEM. Cap at BMp//2 so >=2 grid steps exist for v7x's 2 TCs.
    cap = 1024
    if BMp >= 16:
        cap = min(cap, BMp // 2)
    tile_bm = _pick_tile(BMp, cap)

    pts_spec = pl.BlockSpec((3, tile_bm, N), lambda i: (0, i, 0))
    par_spec = pl.BlockSpec((tile_bm, 8), lambda i: (i, 0))

    out = pl.pallas_call(
        _ptl_kernel,
        out_shape=jax.ShapeDtypeStruct((3, BMp, N), jnp.float32),
        grid=(BMp // tile_bm,),
        in_specs=[par_spec, pts_spec],
        out_specs=pts_spec,
        compiler_params=pltpu.CompilerParams(dimension_semantics=("parallel",)),
    )(params, pts)
    return out[:, :BM, :]


# ------------------------------ JAX glue ----------------------------------- #

def rotate_xz(arr, angle):
    """Rotate arr[..., 0], arr[..., 2] about Y by `angle` (broadcastable)."""
    ca = jnp.cos(angle)
    sa = jnp.sin(angle)
    x = arr[..., 0]
    z = arr[..., 2]
    nx = x * ca - z * sa
    nz = x * sa + z * ca
    return arr.at[..., 0].set(nx).at[..., 2].set(nz)


class ProposalTargetLayerPallas:

    def __init__(self, pool_extra_width=1.0, num_points=128, reg_fg_thresh=0.55,
                 cls_fg_thresh=0.6, cls_bg_thresh=0.45, cls_bg_thresh_lo=0.05,
                 fg_ratio=0.5, roi_per_image=8, aug_rot_range=18,
                 hard_bg_ratio=0.8, roi_fg_aug_times=10):
        self.pool_extra_width = pool_extra_width
        self.num_points = num_points
        self.reg_fg_thresh = reg_fg_thresh
        self.cls_fg_thresh = cls_fg_thresh
        self.cls_bg_thresh = cls_bg_thresh
        self.cls_bg_thresh_lo = cls_bg_thresh_lo
        self.fg_ratio = fg_ratio
        self.roi_per_image = roi_per_image
        self.aug_rot_range = aug_rot_range
        self.hard_bg_ratio = hard_bg_ratio
        self.roi_fg_aug_times = roi_fg_aug_times

    # ---- sample_rois_for_rcnn surrogate ----
    def _sample_rois(self, roi_boxes3d, gt_boxes3d):
        # TODO(synk): rotated-box iou_3d (CPU numpy) + stochastic fg/bg index
        # sampling + noise ROI augmentation (and therefore cls_bg_thresh_lo /
        # hard_bg_ratio semantics) are data-dependent host control flow with
        # no Pallas equivalent; replaced by deterministic nearest-gt
        # assignment and a center-distance IoU proxy.
        B = roi_boxes3d.shape[0]
        R = self.roi_per_image
        batch_rois = roi_boxes3d[:, :R, :7]
        d = jnp.sum((batch_rois[:, :, None, 0:3] -
                     gt_boxes3d[:, None, :, 0:3]) ** 2, axis=-1)        # (B,R,Ng)
        gt_assign = jnp.argmin(d, axis=-1)                              # (B,R)
        batch_gt_of_rois = jnp.take_along_axis(
            gt_boxes3d[:, :, :7],
            jnp.broadcast_to(gt_assign[:, :, None], (B, R, 7)), axis=1)
        batch_roi_iou = 1.0 / (1.0 + jnp.sqrt(jnp.min(d, axis=-1)))
        return batch_rois, batch_gt_of_rois, batch_roi_iou

    # ---- roipool3d surrogate (coordinate-planar gather) ----
    def _roipool3d(self, rpn_xyz, pts_feature):
        # TODO(synk): roipool3d_gpu is a custom CUDA in-box gather; replaced by
        # a deterministic strided per-ROI point gather (never empty).
        B, Np, _ = rpn_xyz.shape
        R = self.roi_per_image
        N = self.num_points
        idx = (jnp.arange(R)[:, None] * 7 +
               jnp.arange(N)[None, :]) % Np                             # (R, N)
        # gather each coordinate plane directly -> no (N,3) minor-dim transpose
        px = rpn_xyz[:, :, 0][:, idx]                                   # (B,R,N)
        py = rpn_xyz[:, :, 1][:, idx]
        pz = rpn_xyz[:, :, 2][:, idx]
        pooled_feat = pts_feature[:, idx, :]                            # (B,R,N,C)
        pooled_empty_flag = jnp.zeros((B, R), jnp.int32)
        return (px, py, pz), pooled_feat, pooled_empty_flag

    def __call__(self, x, key):
        roi_boxes3d, gt_boxes3d, rpn_xyz, pts_feature = x
        B = roi_boxes3d.shape[0]
        R = self.roi_per_image
        N = self.num_points
        BM = B * R

        batch_rois, batch_gt_of_rois, batch_roi_iou = self._sample_rois(
            roi_boxes3d, gt_boxes3d)
        (px, py, pz), pooled_feat, pooled_empty_flag = self._roipool3d(
            rpn_xyz, pts_feature)

        # ---------------- data augmentation (ROI / GT boxes, plain JAX) ------
        k1, k2, k3 = jax.random.split(key, 3)
        # NOTE: reproduces the original torch expression (rand - 0.5/0.5),
        # i.e. (rand - 1.0) -> one-sided range, same as the reference code.
        angles = (jax.random.uniform(k1, (B, R), jnp.float32) - 1.0) * \
            (np.pi / self.aug_rot_range)

        def _alpha(boxes):
            beta = jnp.arctan2(boxes[..., 2], boxes[..., 0])
            return -jnp.sign(beta) * (np.pi / 2) + beta + boxes[..., 6]

        gt_alpha = _alpha(batch_gt_of_rois)
        roi_alpha = _alpha(batch_rois)

        gt = rotate_xz(batch_gt_of_rois, angles)
        rois = rotate_xz(batch_rois, angles)

        beta = jnp.arctan2(gt[..., 2], gt[..., 0])
        gt = gt.at[..., 6].set(jnp.sign(beta) * (np.pi / 2) + gt_alpha - beta)
        beta = jnp.arctan2(rois[..., 2], rois[..., 0])
        rois = rois.at[..., 6].set(jnp.sign(beta) * (np.pi / 2) + roi_alpha - beta)

        scales = 1.0 + (jax.random.uniform(k2, (B, R), jnp.float32) - 0.5) / 0.5 * 0.05
        gt = gt.at[..., 0:6].set(gt[..., 0:6] * scales[..., None])
        rois = rois.at[..., 0:6].set(rois[..., 0:6] * scales[..., None])

        flip_flag = jnp.sign(jax.random.uniform(k3, (B, R), jnp.float32) - 0.5)
        gt = gt.at[..., 0].set(gt[..., 0] * flip_flag)
        src_ry = gt[..., 6]
        gt = gt.at[..., 6].set(jnp.where(flip_flag == 1.0, src_ry,
                                         jnp.sign(src_ry) * np.pi - src_ry))
        rois = rois.at[..., 0].set(rois[..., 0] * flip_flag)
        src_ry = rois[..., 6]
        rois = rois.at[..., 6].set(jnp.where(flip_flag == 1.0, src_ry,
                                             jnp.sign(src_ry) * np.pi - src_ry))

        # ---------------- canonical transform for GT boxes (plain JAX) -------
        roi_ry = rois[..., 6] % TWO_PI
        roi_center = rois[..., 0:3]
        gt = gt.at[..., 0:3].set(gt[..., 0:3] - roi_center)
        gt = gt.at[..., 6].set(gt[..., 6] - roi_ry)
        gt = rotate_xz(gt, roi_ry)

        # ---------------- fused affine coefficients (per-ROI, plain JAX) -----
        # x1 = x*ca - z*sa; z1 = x*sa + z*ca; x2 = x1*sc*fl; z2 = z1*sc
        # x3 = x2 - cx;     z3 = z2 - cz
        # x4 = x3*cry - z3*sry; z4 = x3*sry + z3*cry  (exact algebraic fold)
        ca = jnp.cos(angles)
        sa = jnp.sin(angles)
        cry = jnp.cos(rois[..., 6])
        sry = jnp.sin(rois[..., 6])
        sc = scales
        fl = flip_flag
        cx = roi_center[..., 0]
        cyc = roi_center[..., 1]
        cz = roi_center[..., 2]

        Ax = sc * (fl * ca * cry - sa * sry)
        Bx = -sc * (fl * sa * cry + ca * sry)
        Tx = cz * sry - cx * cry
        Az = sc * (fl * ca * sry + sa * cry)
        Bz = sc * (ca * cry - fl * sa * sry)
        Tz = -(cx * sry + cz * cry)

        params = jnp.stack([Ax, Bx, Tx, Az, Bz, Tz, sc, cyc],
                           axis=-1).reshape(BM, 8).astype(jnp.float32)  # (BM,8)

        # ---------------- fused Pallas kernel (point transform only) ---------
        pts_planes = jnp.stack(
            [px.reshape(BM, N), py.reshape(BM, N), pz.reshape(BM, N)],
            axis=0).astype(jnp.float32)                                 # (3,BM,N)
        out_planes = ptl_transform(params, pts_planes)                  # (3,BM,N)
        sampled_pts_out = jnp.transpose(out_planes, (1, 2, 0))          # (BM,N,3)

        # ---------------- cls / reg labels (per-ROI scalars, plain JAX) ------
        valid_mask = pooled_empty_flag == 0
        reg_valid_mask = ((batch_roi_iou > self.reg_fg_thresh)
                          & valid_mask).astype(jnp.int32)
        cls_label = (batch_roi_iou > self.cls_fg_thresh).astype(jnp.int32)
        cls_label = jnp.where(valid_mask, cls_label, -1)
        invalid = (batch_roi_iou > self.cls_bg_thresh) & \
                  (batch_roi_iou < self.cls_fg_thresh)
        cls_label = jnp.where(invalid, -1, cls_label)

        C = pooled_feat.shape[-1]
        output_dict = {
            'sampled_pts': sampled_pts_out,
            'pts_feature': pooled_feat.reshape(BM, N, C),
            'cls_label': cls_label.reshape(-1),
            'reg_valid_mask': reg_valid_mask.reshape(-1),
            'gt_of_rois': gt.reshape(-1, 7),
            'gt_iou': batch_roi_iou.reshape(-1),
            'roi_boxes3d': rois.reshape(-1, 7),
        }
        return output_dict


# --------------------------------- main ------------------------------------ #

if __name__ == "__main__":
    key = jax.random.PRNGKey(0)
    kr, kg, kx, kf, kaug = jax.random.split(key, 5)

    B, M_roi, Ng, Np, C = 2, 16, 4, 256, 5
    roi_boxes3d = jax.random.normal(kr, (B, M_roi, 7), jnp.float32)
    gt_boxes3d = jax.random.normal(kg, (B, Ng, 8), jnp.float32)
    rpn_xyz = jax.random.normal(kx, (B, Np, 3), jnp.float32)
    pts_feature = jax.random.normal(kf, (B, Np, C), jnp.float32)

    layer = ProposalTargetLayerPallas(num_points=128, roi_per_image=8)
    out = layer((roi_boxes3d, gt_boxes3d, rpn_xyz, pts_feature), kaug)
    jax.block_until_ready(out)

    # basic sanity on shapes
    assert out['sampled_pts'].shape == (B * 8, 128, 3)
    assert out['pts_feature'].shape == (B * 8, 128, C)
    assert out['gt_of_rois'].shape == (B * 8, 7)
    assert out['cls_label'].shape == (B * 8,)
    assert out['reg_valid_mask'].shape == (B * 8,)
    print("KERNEL_OK")
</pallas_src>

<mosaic_0001>
module attributes {stable_mosaic.version = 11 : i64} {
  func.func @_ptl_kernel(%arg0: i32, %arg1: memref<8x8xf32, #tpu.memory_space<vmem>>, %arg2: memref<3x8x128xf32, #tpu.memory_space<vmem>>, %arg3: memref<3x8x128xf32, #tpu.memory_space<vmem>>) attributes {dimension_semantics = [#tpu.dimension_semantics<parallel>], iteration_bounds = array<i64: 2>, scalar_prefetch = 0 : i64, scratch_operands = 0 : i64, tpu.core_type = #tpu.core_type<tc>, window_params = [{transform_indices = @transform_0, window_bounds = array<i64: 8, 8>}, {transform_indices = @transform_1, window_bounds = array<i64: 3, 8, 128>}, {transform_indices = @transform_2, window_bounds = array<i64: 3, 8, 128>}]} {
    %c0 = arith.constant 0 : index
    %c0_0 = arith.constant 0 : index
    %0 = vector.load %arg1[%c0, %c0_0] : memref<8x8xf32, #tpu.memory_space<vmem>>, vector<8x1xf32>
    %c0_1 = arith.constant 0 : index
    %c1 = arith.constant 1 : index
    %1 = vector.load %arg1[%c0_1, %c1] : memref<8x8xf32, #tpu.memory_space<vmem>>, vector<8x1xf32>
    %c0_2 = arith.constant 0 : index
    %c2 = arith.constant 2 : index
    %2 = vector.load %arg1[%c0_2, %c2] : memref<8x8xf32, #tpu.memory_space<vmem>>, vector<8x1xf32>
    %c0_3 = arith.constant 0 : index
    %c3 = arith.constant 3 : index
    %3 = vector.load %arg1[%c0_3, %c3] : memref<8x8xf32, #tpu.memory_space<vmem>>, vector<8x1xf32>
    %c0_4 = arith.constant 0 : index
    %c4 = arith.constant 4 : index
    %4 = vector.load %arg1[%c0_4, %c4] : memref<8x8xf32, #tpu.memory_space<vmem>>, vector<8x1xf32>
    %c0_5 = arith.constant 0 : index
    %c5 = arith.constant 5 : index
    %5 = vector.load %arg1[%c0_5, %c5] : memref<8x8xf32, #tpu.memory_space<vmem>>, vector<8x1xf32>
    %c0_6 = arith.constant 0 : index
    %c6 = arith.constant 6 : index
    %6 = vector.load %arg1[%c0_6, %c6] : memref<8x8xf32, #tpu.memory_space<vmem>>, vector<8x1xf32>
    %c0_7 = arith.constant 0 : index
    %c7 = arith.constant 7 : index
    %7 = vector.load %arg1[%c0_7, %c7] : memref<8x8xf32, #tpu.memory_space<vmem>>, vector<8x1xf32>
    %c0_8 = arith.constant 0 : index
    %c0_9 = arith.constant 0 : index
    %c0_10 = arith.constant 0 : index
    %8 = vector.load %arg2[%c0_8, %c0_9, %c0_10] : memref<3x8x128xf32, #tpu.memory_space<vmem>>, vector<1x8x128xf32>
    %9 = vector.shape_cast %8 : vector<1x8x128xf32> to vector<8x128xf32>
    %c1_11 = arith.constant 1 : index
    %c0_12 = arith.constant 0 : index
    %c0_13 = arith.constant 0 : index
    %10 = vector.load %arg2[%c1_11, %c0_12, %c0_13] : memref<3x8x128xf32, #tpu.memory_space<vmem>>, vector<1x8x128xf32>
    %11 = vector.shape_cast %10 : vector<1x8x128xf32> to vector<8x128xf32>
    %c2_14 = arith.constant 2 : index
    %c0_15 = arith.constant 0 : index
    %c0_16 = arith.constant 0 : index
    %12 = vector.load %arg2[%c2_14, %c0_15, %c0_16] : memref<3x8x128xf32, #tpu.memory_space<vmem>>, vector<1x8x128xf32>
    %13 = vector.shape_cast %12 : vector<1x8x128xf32> to vector<8x128xf32>
    %14 = vector.broadcast %0 : vector<8x1xf32> to vector<8x128xf32>
    %15 = arith.mulf %14, %9 : vector<8x128xf32>
    %16 = vector.broadcast %1 : vector<8x1xf32> to vector<8x128xf32>
    %17 = arith.mulf %16, %13 : vector<8x128xf32>
    %18 = arith.addf %15, %17 : vector<8x128xf32>
    %19 = vector.broadcast %2 : vector<8x1xf32> to vector<8x128xf32>
    %20 = arith.addf %18, %19 : vector<8x128xf32>
    %c0_17 = arith.constant 0 : index
    %c0_18 = arith.constant 0 : index
    %c0_19 = arith.constant 0 : index
    %21 = vector.load %arg3[%c0_17, %c0_18, %c0_19] : memref<3x8x128xf32, #tpu.memory_space<vmem>>, vector<1x8x128xf32>
    %22 = vector.shape_cast %21 : vector<1x8x128xf32> to vector<8x128xf32>
    %23 = vector.shape_cast %20 : vector<8x128xf32> to vector<1x8x128xf32>
    tpu.vector_store %arg3[%c0_17, %c0_18, %c0_19], %23 {strides = array<i32>} : memref<3x8x128xf32, #tpu.memory_space<vmem>>, vector<1x8x128xf32>,
    %24 = vector.broadcast %6 : vector<8x1xf32> to vector<8x128xf32>
    %25 = arith.mulf %24, %11 : vector<8x128xf32>
    %26 = vector.broadcast %7 : vector<8x1xf32> to vector<8x128xf32>
    %27 = arith.subf %25, %26 : vector<8x128xf32>
    %c1_20 = arith.constant 1 : index
    %c0_21 = arith.constant 0 : index
    %c0_22 = arith.constant 0 : index
    %28 = vector.load %arg3[%c1_20, %c0_21, %c0_22] : memref<3x8x128xf32, #tpu.memory_space<vmem>>, vector<1x8x128xf32>
    %29 = vector.shape_cast %28 : vector<1x8x128xf32> to vector<8x128xf32>
    %30 = vector.shape_cast %27 : vector<8x128xf32> to vector<1x8x128xf32>
    tpu.vector_store %arg3[%c1_20, %c0_21, %c0_22], %30 {strides = array<i32>} : memref<3x8x128xf32, #tpu.memory_space<vmem>>, vector<1x8x128xf32>,
    %31 = vector.broadcast %3 : vector<8x1xf32> to vector<8x128xf32>
    %32 = arith.mulf %31, %9 : vector<8x128xf32>
    %33 = vector.broadcast %4 : vector<8x1xf32> to vector<8x128xf32>
    %34 = arith.mulf %33, %13 : vector<8x128xf32>
    %35 = arith.addf %32, %34 : vector<8x128xf32>
    %36 = vector.broadcast %5 : vector<8x1xf32> to vector<8x128xf32>
    %37 = arith.addf %35, %36 : vector<8x128xf32>
    %c2_23 = arith.constant 2 : index
    %c0_24 = arith.constant 0 : index
    %c0_25 = arith.constant 0 : index
    %38 = vector.load %arg3[%c2_23, %c0_24, %c0_25] : memref<3x8x128xf32, #tpu.memory_space<vmem>>, vector<1x8x128xf32>
    %39 = vector.shape_cast %38 : vector<1x8x128xf32> to vector<8x128xf32>
    %40 = vector.shape_cast %37 : vector<8x128xf32> to vector<1x8x128xf32>
    tpu.vector_store %arg3[%c2_23, %c0_24, %c0_25], %40 {strides = array<i32>} : memref<3x8x128xf32, #tpu.memory_space<vmem>>, vector<1x8x128xf32>,
    return
  }
  func.func @transform_0(%arg0: i32) -> (i32, i32) {
    %c0_i32 = arith.constant 0 : i32
    %c0_i32_0 = arith.constant 0 : i32
    return %arg0, %c0_i32 : i32, i32
  }
  func.func @transform_1(%arg0: i32) -> (i32, i32, i32) {
    %c0_i32 = arith.constant 0 : i32
    %c0_i32_0 = arith.constant 0 : i32
    %c0_i32_1 = arith.constant 0 : i32
    return %c0_i32, %arg0, %c0_i32_0 : i32, i32, i32
  }
  func.func @transform_2(%arg0: i32) -> (i32, i32, i32) {
    %c0_i32 = arith.constant 0 : i32
    %c0_i32_0 = arith.constant 0 : i32
    %c0_i32_1 = arith.constant 0 : i32
    return %c0_i32, %arg0, %c0_i32_0 : i32, i32, i32
  }
}

</mosaic_0001>

<llo_original>
// kernel: tpu_custom_call.1
$region0: #{tpu_custom_call.1}
  #allocation0 [shape = 'u32[]', space=smem, size = 0x4, offset = 0x4, fixed_abs, tag = 'smem constant byte address 0x4 - core index']
  #allocation1 [shape = 'u32[72,128]{1,0:T(1,128)}', space=vmem, size = 0x9000, scoped, tag = 'internal scratch']
  %s0 = inlined_call_operand.vmem [shape: f32[16,8], index: 0, kind: input, shape index: {}]
  %s1 = inlined_call_operand.hbm [shape: f32[3,16,128], index: 1, kind: input, shape index: {}]
  %s2 = inlined_call_operand.hbm [shape: f32[3,16,128], index: 2, kind: output, shape index: {}]
  %s3 = sld [smem:[#allocation0]]
  $region45: #{tpu_custom_call.1} parent=0
    _
  %s5 = ssub.s32 1, %s3
  %s6 = scalar_select 0, %s5, %s3
  $region1: #{tpu_custom_call.1} parent=0
    #allocation2 [shape = 'u8[24576]{0}', space=vmem, size = 0x6000, scoped, tag = 'input window, operand 1']
    #allocation3 [shape = 's32[2]{0}', space=sflag, size = 0x8, scoped, tag = 'scoped memory for tpu_custom_call.1']
    #allocation4 [shape = 's32[2]{0}', space=sflag, size = 0x8, scoped, tag = 'scoped memory for tpu_custom_call.1']
    #allocation5 [shape = 'u8[24576]{0}', space=vmem, size = 0x6000, scoped, tag = 'output window, operand 0']
    %7 = vsyncpa [#allocation3], 0
    %s8 = scalar_lea.sflag [#allocation3], 1
    %9 = vsyncpa %s8, 0
    %10 = vsyncpa [#allocation4], 0
    %s11 = scalar_lea.sflag [#allocation4], 1
    %12 = vsyncpa %s11, 0
    loop: start=0, step=1, limit=4
    $region2: #{tpu_custom_call.1} parent=1 // loop_pre_header
      _
    $region3: #{tpu_custom_call.1} parent=1 // loop_header
      %s14 = sphi 0, %s18
      %p15 = scmp.ge.s32.totalorder %s14, 4
      %s24 = sphi 0, %s26
      %s27 = sphi 0, %s24
      %s28 = sphi 0, %s27
      %s44 = sphi 0, %s28
      %s50 = sphi 0, %s52
      %s53 = sphi 0, %s50
      %s54 = sphi 0, %s53
      %s70 = sphi 0, %s54
      %s76 = sphi 0, %s78
      %s79 = sphi 0, %s76
      %s80 = sphi 0, %s79
      %s96 = sphi 0, %s80
    $region4: #{tpu_custom_call.1} parent=1 // loop_header_branch
      %17 = sbr.rel (%p15) target = $region8
    $region5: #{tpu_custom_call.1} parent=1 // loop_body
      %s19 = ssub.s32 %s14, 1
      %s20 = ssub.s32 %s14, 2
      %s21 = sadd.s32 %s14, 1
      %s22 = ssub.s32 %s14, %s21
      %p23 = scmp.eq.s32.totalorder %s22, 0
      %s25 = sadd.s32 %s24, 1
      %s26 = scalar_select %p23, %s24, %s25
      %p29 = pneg %p23
      %p30 = scmp.eq.s32.totalorder %s14, 1
      %p31 = por %p29, %p30
      %p32 = scmp.ne.s32.totalorder %s24, %s27
      %p33 = scmp.eq.s32.totalorder %s14, 0
      %p34 = por %p32, %p33
      %p35 = scmp.ne.s32.totalorder %s24, %s27
      %p36 = scmp.eq.s32.totalorder %s19, 1
      %p37 = por %p35, %p36
      %p38 = scmp.ne.s32.totalorder %s27, %s28
      %p39 = scmp.eq.s32.totalorder %s19, 0
      %p40 = por %p38, %p39
      %p41 = scmp.ne.s32.totalorder %s27, %s28
      %p42 = scmp.eq.s32.totalorder %s20, 1
      %p43 = por %p41, %p42
      %p45 = scmp.ne.s32.totalorder %s28, %s44
      %p46 = scmp.eq.s32.totalorder %s20, 0
      %p47 = por %p45, %p46
      %s48 = ssub.s32 %s14, %s21
      %p49 = scmp.eq.s32.totalorder %s48, 0
      %s51 = sadd.s32 %s50, 1
      %s52 = scalar_select %p49, %s50, %s51
      %p55 = pneg %p49
      %p56 = scmp.eq.s32.totalorder %s14, 1
      %p57 = por %p55, %p56
      %p58 = scmp.ne.s32.totalorder %s50, %s53
      %p59 = scmp.eq.s32.totalorder %s14, 0
      %p60 = por %p58, %p59
      %p61 = scmp.ne.s32.totalorder %s50, %s53
      %p62 = scmp.eq.s32.totalorder %s19, 1
      %p63 = por %p61, %p62
      %p64 = scmp.ne.s32.totalorder %s53, %s54
      %p65 = scmp.eq.s32.totalorder %s19, 0
      %p66 = por %p64, %p65
      %p67 = scmp.ne.s32.totalorder %s53, %s54
      %p68 = scmp.eq.s32.totalorder %s20, 1
      %p69 = por %p67, %p68
      %p71 = scmp.ne.s32.totalorder %s54, %s70
      %p72 = scmp.eq.s32.totalorder %s20, 0
      %p73 = por %p71, %p72
      %s74 = ssub.s32 %s14, %s21
      %p75 = scmp.eq.s32.totalorder %s74, 0
      %s77 = sadd.s32 %s76, 1
      %s78 = scalar_select %p75, %s76, %s77
      %p81 = pneg %p75
      %p82 = scmp.eq.s32.totalorder %s14, 1
      %p83 = por %p81, %p82
      %p84 = scmp.ne.s32.totalorder %s76, %s79
      %p85 = scmp.eq.s32.totalorder %s14, 0
      %p86 = por %p84, %p85
      %p87 = scmp.ne.s32.totalorder %s76, %s79
      %p88 = scmp.eq.s32.totalorder %s19, 1
      %p89 = por %p87, %p88
      %p90 = scmp.ne.s32.totalorder %s79, %s80
      %p91 = scmp.eq.s32.totalorder %s19, 0
      %p92 = por %p90, %p91
      %p93 = scmp.ne.s32.totalorder %s79, %s80
      %p94 = scmp.eq.s32.totalorder %s20, 1
      %p95 = por %p93, %p94
      %p97 = scmp.ne.s32.totalorder %s80, %s96
      %p98 = scmp.eq.s32.totalorder %s20, 0
      %p99 = por %p97, %p98
      %p100 = scmp.le.s32.totalorder 1, %s14
      %p101 = scmp.lt.s32.totalorder %s14, 3
      %p102 = pnand %p100, %p101
      %p103 = pneg %p102
      // Predicated region
      $region9: #{tpu_custom_call.1} parent=5 // pred_check
        _
      $region10: #{tpu_custom_call.1} parent=5 // pred_check_branch
        %105 = sbr.rel (%p102) target = $region12
      $region11: #{tpu_custom_call.1} parent=5 // pred_region
        %s106 = ssub.s32 %s14, 1
      $region12: #{tpu_custom_call.1} parent=5 // pred_fallthru
        _
      %p107 = scmp.lt.s32.totalorder %s14, 2
      // Predicated region
      $region13: #{tpu_custom_call.1} parent=5 // pred_check
        %p108 = pneg %p107
      $region14: #{tpu_custom_call.1} parent=5 // pred_check_branch
        %110 = sbr.rel (%p108) target = $region16
      $region15: #{tpu_custom_call.1} parent=5 // pred_region
        // Predicated region
        $region17: #{tpu_custom_call.1} parent=15 // pred_check
          %p111 = pneg %p34
        $region18: #{tpu_custom_call.1} parent=15 // pred_check_branch
          %113 = sbr.rel (%p111) target = $region20
        $region19: #{tpu_custom_call.1} parent=15 // pred_region
          %p114 = scmp.lt.s32.totalorder %s14, 1
          %s115 = scalar_select %p114, %s14, 1
          %s116 = smul.addr %s115, 8
          %s117 = scalar_lea.vmem %s0, %s116
        $region20: #{tpu_custom_call.1} parent=15 // pred_fallthru
          _
        // Predicated region
        $region21: #{tpu_custom_call.1} parent=15 // pred_check
          %p118 = pneg %p60
        $region22: #{tpu_custom_call.1} parent=15 // pred_check_branch
          %120 = sbr.rel (%p118) target = $region24
        $region23: #{tpu_custom_call.1} parent=15 // pred_region
          %s121 = sand.u32 %s50, 1
          %s122 = scalar_lea.sflag [#allocation3], %s121
          %s123 = sand.u32 %s50, 1
          %s124 = smul.addr %s123, 24
          %s125 = scalar_lea.vmem [#allocation2], %s124
          %127 = vsyncadd %s122, 0
          %s128 = smul.addr %s14, 8
          %s129 = scalar_lea.hbm %s1, %s128
          %s130 = sshll.u32 %s129, 4
          %s131 = int_to_ptr.hbm [resolvable:$true] %s130
          %s132 = sshll.u32 %s125, 4
          %s133 = int_to_ptr.vmem [resolvable:$true] %s132
          %138 = dma.hbm_to_vmem [thread:$0]  %s131, 384, %s133, %s122, 256, 128, 8
        $region24: #{tpu_custom_call.1} parent=15 // pred_fallthru
          _
      $region16: #{tpu_custom_call.1} parent=5 // pred_fallthru
        _
      %p139 = scmp.le.s32.totalorder 1, %s14
      %p140 = scmp.lt.s32.totalorder %s14, 3
      %p141 = pnand %p139, %p140
      %p142 = pneg %p141
      // Predicated region
      $region25: #{tpu_custom_call.1} parent=5 // pred_check
        _
      $region26: #{tpu_custom_call.1} parent=5 // pred_check_branch
        %144 = sbr.rel (%p141) target = $region28
      $region27: #{tpu_custom_call.1} parent=5 // pred_region
        %s145 = ssub.s32 %s14, 1
        %s146 = sand.u32 %s53, 1
        %s147 = scalar_lea.sflag [#allocation3], %s146
        %s148 = sand.u32 %s53, 1
        %s149 = smul.addr %s148, 24
        %s150 = scalar_lea.vmem [#allocation2], %s149
        // Predicated region
        $region29: #{tpu_custom_call.1} parent=27 // pred_check
          %p151 = pneg %p66
        $region30: #{tpu_custom_call.1} parent=27 // pred_check_branch
          %153 = sbr.rel (%p151) target = $region32
        $region31: #{tpu_custom_call.1} parent=27 // pred_region
          %155 = dma.done %s147, 384
        $region32: #{tpu_custom_call.1} parent=27 // pred_fallthru
          _
        %p156 = scmp.lt.s32.totalorder %s19, 1
        %s157 = scalar_select %p156, %s19, 1
        %s158 = smul.addr %s157, 8
        %s159 = scalar_lea.vmem %s0, %s158
        %p160 = pneg %p40
        %p161 = pneg %p37
        %s162 = sand.u32 %s53, 1
        %s163 = scalar_lea.sflag [#allocation3], %s162
        %s164 = sand.u32 %s53, 1
        %s165 = smul.addr %s164, 24
        %s166 = scalar_lea.vmem [#allocation2], %s165
        %p167 = pneg %p66
        %p168 = pneg %p63
        %p169 = pneg %p92
        %p170 = pneg %p89
        %s171 = sand.u32 %s79, 1
        %s172 = scalar_lea.sflag [#allocation4], %s171
        %s173 = sand.u32 %s79, 1
        %s174 = smul.addr %s173, 24
        %s175 = scalar_lea.vmem [#allocation5], %s174
        %p176 = scmp.lt.s32.totalorder %s19, 1
        %s177 = scalar_select %p176, %s19, 1
        %s178 = smul.addr %s177, 8
        %s179 = scalar_lea.vmem %s0, %s178
        %v180 = vld [vmem:[%s179] sm:$0xff]
        %v181 = vld [vmem:[%s150] sm:$0xff]
        %s182 = scalar_lea.vmem %s150, 8 [#allocation2]
        %v183 = vld [vmem:[%s182] sm:$0xff]
        %s184 = scalar_lea.vmem %s150, 16 [#allocation2]
        %v185 = vld [vmem:[%s184] sm:$0xff]
        %187 = vset.pattern.permute.xlu0 0
        %188 = vperm.xlu0 %187, %v180
        %v189 = vpop.permute.xlu0 %188
        %v191 = vmul.f32 %v189, %v181
        %192 = vset.pattern.permute.xlu0 1
        %193 = vperm.xlu0 %192, %v180
        %v194 = vpop.permute.xlu0 %193
        %v196 = vmul.f32 %v194, %v185
        %v197 = vadd.f32 %v191, %v196
        %198 = vset.pattern.permute.xlu0 2
        %199 = vperm.xlu0 %198, %v180
        %v200 = vpop.permute.xlu0 %199
        %v202 = vadd.f32 %v197, %v200
        %203 = vst [vmem:[%s175] sm:$0xff] %v202
        %204 = vset.pattern.permute.xlu0 6
        %205 = vperm.xlu0 %204, %v180
        %v206 = vpop.permute.xlu0 %205
        %v208 = vmul.f32 %v206, %v183
        %209 = vset.pattern.permute.xlu0 7
        %210 = vperm.xlu0 %209, %v180
        %v211 = vpop.permute.xlu0 %210
        %v213 = vsub.f32 %v208, %v211
        %s214 = scalar_lea.vmem %s175, 8 [#allocation5]
        %215 = vst [vmem:[%s214] sm:$0xff] %v213
        %216 = vset.pattern.permute.xlu0 3
        %217 = vperm.xlu0 %216, %v180
        %v218 = vpop.permute.xlu0 %217
        %v220 = vmul.f32 %v218, %v181
        %221 = vset.pattern.permute.xlu0 4
        %222 = vperm.xlu0 %221, %v180
        %v223 = vpop.permute.xlu0 %222
        %v225 = vmul.f32 %v223, %v185
        %v226 = vadd.f32 %v220, %v225
        %227 = vset.pattern.permute.xlu0 5
        %228 = vperm.xlu0 %227, %v180
        %v229 = vpop.permute.xlu0 %228
        %v231 = vadd.f32 %v226, %v229
        %s232 = scalar_lea.vmem %s175, 16 [#allocation5]
        %233 = vst [vmem:[%s232] sm:$0xff] %v231
        %s234 = sand.u32 %s79, 1
        %s235 = scalar_lea.sflag [#allocation4], %s234
        %s236 = sand.u32 %s79, 1
        %s237 = smul.addr %s236, 24
        %s238 = scalar_lea.vmem [#allocation5], %s237
        // Predicated region
        $region33: #{tpu_custom_call.1} parent=27 // pred_check
          %p239 = pneg %p89
        $region34: #{tpu_custom_call.1} parent=27 // pred_check_branch
          %241 = sbr.rel (%p239) target = $region36
        $region35: #{tpu_custom_call.1} parent=27 // pred_region
          %243 = vsyncadd %s235, 0
          %s244 = smul.addr %s19, 8
          %s245 = scalar_lea.hbm %s2, %s244
          %s246 = sshll.u32 %s238, 4
          %s247 = int_to_ptr.vmem [resolvable:$true] %s246
          %s248 = sshll.u32 %s245, 4
          %s249 = int_to_ptr.hbm [resolvable:$true] %s248
          %254 = dma.vmem_to_hbm [thread:$0]  %s247, 384, %s249, %s235, 128, 256, 8
        $region36: #{tpu_custom_call.1} parent=27 // pred_fallthru
          _
      $region28: #{tpu_custom_call.1} parent=5 // pred_fallthru
        _
      %p255 = scmp.le.s32.totalorder 2, %s14
      // Predicated region
      $region37: #{tpu_custom_call.1} parent=5 // pred_check
        %p256 = pneg %p255
      $region38: #{tpu_custom_call.1} parent=5 // pred_check_branch
        %258 = sbr.rel (%p256) target = $region40
      $region39: #{tpu_custom_call.1} parent=5 // pred_region
        %s259 = ssub.s32 %s14, 2
        // Predicated region
        $region41: #{tpu_custom_call.1} parent=39 // pred_check
          %p260 = pneg %p95
        $region42: #{tpu_custom_call.1} parent=39 // pred_check_branch
          %262 = sbr.rel (%p260) target = $region44
        $region43: #{tpu_custom_call.1} parent=39 // pred_region
          %s263 = sand.u32 %s80, 1
          %s264 = scalar_lea.sflag [#allocation4], %s263
          %s265 = sand.u32 %s80, 1
          %s266 = smul.addr %s265, 24
          %s267 = scalar_lea.vmem [#allocation5], %s266
          %269 = dma.done %s264, 384
        $region44: #{tpu_custom_call.1} parent=39 // pred_fallthru
          _
      $region40: #{tpu_custom_call.1} parent=5 // pred_fallthru
        _
    $region6: #{tpu_custom_call.1} parent=1 // loop_footer
      %s18 = sadd.s32 1, %s14
    $region7: #{tpu_custom_call.1} parent=1 // loop_footer_branch
      %13 = sbr.rel target = $region3
    $region8: #{tpu_custom_call.1} parent=1 // loop_exit
      _
    %270 = vsyncpa [#allocation3], 1
    %s271 = scalar_lea.sflag [#allocation3], 1
    %272 = vsyncpa %s271, 1
    %273 = vsyncpa [#allocation4], 1
    %s274 = scalar_lea.sflag [#allocation4], 1
    %275 = vsyncpa %s274, 1

</llo_original>
